<compile_context>
chip_gen: v7x
topology: tpu7x:2x2x1
jax: 0.10.0
libtpu: 0.0.40
codegen_flags: <defaults>
</compile_context>

<pallas_src>
import jax
import jax.numpy as jnp
from jax.experimental import pallas as pl
from jax.experimental.pallas import tpu as pltpu


def _blur_kernel(x_ref, o_ref):
    # x_ref / o_ref: (Bp, H, W) block of independent (n, c) planes in VMEM.
    H = x_ref.shape[1]
    W = x_ref.shape[2]
    x = x_ref[...].astype(jnp.float32)

    # Horizontal (W / lane) pass: r[j] = x[j-1] + 2*x[j] + x[j+1], reflect
    # border (x[-1] -> x[1], x[W] -> x[W-2]).  Shifts expressed as slices +
    # concat of the in-VMEM tile (no padded HBM array).
    # TODO(synk): the +/-1 lane shifts could go through pltpu.roll (idle XLU
    # slot) instead of lane-sliced copies once tiles get multi-MiB.
    left = jnp.concatenate([x[:, :, 1:2], x[:, :, : W - 1]], axis=2)       # x[j-1]
    right = jnp.concatenate([x[:, :, 1:W], x[:, :, W - 2 : W - 1]], axis=2)  # x[j+1]
    r = left + 2.0 * x + right

    # Vertical (H / sublane) pass: out[i] = (r[i-1] + 2*r[i] + r[i+1]) / 16.
    up = jnp.concatenate([r[:, 1:2, :], r[:, : H - 1, :]], axis=1)         # r[i-1]
    down = jnp.concatenate([r[:, 1:H, :], r[:, H - 2 : H - 1, :]], axis=1)  # r[i+1]
    o_ref[...] = ((up + 2.0 * r + down) * (1.0 / 16.0)).astype(o_ref.dtype)


def blur(x: jax.Array, *, vmem_budget_bytes: int = 20 * 1024 * 1024) -> jax.Array:
    """Equivalent of Blur.forward for x of shape (N, C, H, W); same dtype out."""
    N, C, H, W = x.shape
    if H < 2 or W < 2:
        raise ValueError("Blur with reflect padding requires H >= 2 and W >= 2")
    dtype = x.dtype
    NC = N * C
    planes = x.reshape(NC, H, W)  # merging leading dims is free (no HBM copy)

    # ---- choose how many planes to batch per grid step --------------------
    itemsize = jnp.dtype(dtype).itemsize
    # per-element VMEM cost estimate: double-buffered in+out blocks
    # (2 * (in + out)) plus ~4 f32 working copies inside the kernel.
    bytes_per_elem = 4 * itemsize + 4 * 4
    max_block_elems = max(H * W, vmem_budget_bytes // bytes_per_elem)
    bp_cap = max(1, min(max_block_elems // (H * W), NC))
    if NC >= 2:
        # keep at least 2 grid steps so the 'parallel' axis can shard across
        # v7x's two TensorCores (harmless on v5e/v6e).
        bp_cap = min(bp_cap, max(1, NC // 2))
    bp = 1
    for d in range(1, bp_cap + 1):  # largest divisor of NC within the cap
        if NC % d == 0:
            bp = d
    # TODO(synk): for planes too large for a whole (1, H, W) block in VMEM,
    # add row tiling with a 1-row halo instead of relying on a bigger block.

    grid = (NC // bp,)
    out = pl.pallas_call(
        _blur_kernel,
        out_shape=jax.ShapeDtypeStruct((NC, H, W), dtype),
        grid=grid,
        in_specs=[pl.BlockSpec((bp, H, W), lambda i: (i, 0, 0))],
        out_specs=pl.BlockSpec((bp, H, W), lambda i: (i, 0, 0)),
        compiler_params=pltpu.CompilerParams(
            dimension_semantics=("parallel",),
            vmem_limit_bytes=48 * 1024 * 1024,
        ),
    )(planes)
    return out.reshape(N, C, H, W)


def _reference_blur(x: jax.Array) -> jax.Array:
    # Plain-JAX reference (materialized reflect pad + 9-tap sum).
    f = jnp.array([1.0, 2.0, 1.0], dtype=jnp.float32)
    k2d = (f[None, :] * f[:, None]) / 16.0
    N, C, H, W = x.shape
    xp = jnp.pad(
        x.astype(jnp.float32).reshape(N * C, H, W),
        ((0, 0), (1, 1), (1, 1)),
        mode="reflect",
    )
    acc = jnp.zeros((N * C, H, W), jnp.float32)
    for di in range(3):
        for dj in range(3):
            acc = acc + k2d[di, dj] * xp[:, di : di + H, dj : dj + W]
    return acc.reshape(N, C, H, W).astype(x.dtype)


if __name__ == "__main__":
    key = jax.random.PRNGKey(0)
    x = jax.random.normal(key, (2, 4, 16, 16), dtype=jnp.float32)

    y = blur(x)
    y = jax.block_until_ready(y)

    y_ref = _reference_blur(x)
    assert y.shape == x.shape and y.dtype == x.dtype
    assert jnp.allclose(y, y_ref, atol=1e-5, rtol=1e-5)

    print("KERNEL_OK")
</pallas_src>

<mosaic_0001>
module attributes {stable_mosaic.version = 11 : i64} {
  func.func @_blur_kernel(%arg0: i32, %arg1: memref<4x16x16xf32, #tpu.memory_space<vmem>>, %arg2: memref<4x16x16xf32, #tpu.memory_space<vmem>>) attributes {dimension_semantics = [#tpu.dimension_semantics<parallel>], iteration_bounds = array<i64: 2>, scalar_prefetch = 0 : i64, scratch_operands = 0 : i64, tpu.core_type = #tpu.core_type<tc>, window_params = [{transform_indices = @transform_0, window_bounds = array<i64: 4, 16, 16>}, {transform_indices = @transform_1, window_bounds = array<i64: 4, 16, 16>}]} {
    %c0 = arith.constant 0 : index
    %c0_0 = arith.constant 0 : index
    %c0_1 = arith.constant 0 : index
    %0 = vector.load %arg1[%c0, %c0_0, %c0_1] : memref<4x16x16xf32, #tpu.memory_space<vmem>>, vector<4x16x16xf32>
    %1 = vector.extract_strided_slice %0 {offsets = [0, 0, 1], sizes = [4, 16, 1], strides = [1, 1, 1]} : vector<4x16x16xf32> to vector<4x16x1xf32>
    %2 = vector.extract_strided_slice %0 {offsets = [0, 0, 0], sizes = [4, 16, 15], strides = [1, 1, 1]} : vector<4x16x16xf32> to vector<4x16x15xf32>
    %3 = tpu.concatenate %1, %2 in 2 : vector<4x16x1xf32>, vector<4x16x15xf32> -> vector<4x16x16xf32>
    %4 = vector.extract_strided_slice %0 {offsets = [0, 0, 1], sizes = [4, 16, 15], strides = [1, 1, 1]} : vector<4x16x16xf32> to vector<4x16x15xf32>
    %5 = vector.extract_strided_slice %0 {offsets = [0, 0, 14], sizes = [4, 16, 1], strides = [1, 1, 1]} : vector<4x16x16xf32> to vector<4x16x1xf32>
    %6 = tpu.concatenate %4, %5 in 2 : vector<4x16x15xf32>, vector<4x16x1xf32> -> vector<4x16x16xf32>
    %cst = arith.constant 2.000000e+00 : f32
    %7 = vector.broadcast %cst : f32 to vector<4x16x16xf32>
    %8 = arith.mulf %7, %0 : vector<4x16x16xf32>
    %9 = arith.addf %3, %8 : vector<4x16x16xf32>
    %10 = arith.addf %9, %6 : vector<4x16x16xf32>
    %11 = vector.extract_strided_slice %10 {offsets = [0, 1, 0], sizes = [4, 1, 16], strides = [1, 1, 1]} : vector<4x16x16xf32> to vector<4x1x16xf32>
    %12 = vector.extract_strided_slice %10 {offsets = [0, 0, 0], sizes = [4, 15, 16], strides = [1, 1, 1]} : vector<4x16x16xf32> to vector<4x15x16xf32>
    %13 = tpu.concatenate %11, %12 in 1 : vector<4x1x16xf32>, vector<4x15x16xf32> -> vector<4x16x16xf32>
    %14 = vector.extract_strided_slice %10 {offsets = [0, 1, 0], sizes = [4, 15, 16], strides = [1, 1, 1]} : vector<4x16x16xf32> to vector<4x15x16xf32>
    %15 = vector.extract_strided_slice %10 {offsets = [0, 14, 0], sizes = [4, 1, 16], strides = [1, 1, 1]} : vector<4x16x16xf32> to vector<4x1x16xf32>
    %16 = tpu.concatenate %14, %15 in 1 : vector<4x15x16xf32>, vector<4x1x16xf32> -> vector<4x16x16xf32>
    %cst_2 = arith.constant 2.000000e+00 : f32
    %17 = vector.broadcast %cst_2 : f32 to vector<4x16x16xf32>
    %18 = arith.mulf %17, %10 : vector<4x16x16xf32>
    %19 = arith.addf %13, %18 : vector<4x16x16xf32>
    %20 = arith.addf %19, %16 : vector<4x16x16xf32>
    %cst_3 = arith.constant 6.250000e-02 : f32
    %21 = vector.broadcast %cst_3 : f32 to vector<4x16x16xf32>
    %22 = arith.mulf %20, %21 : vector<4x16x16xf32>
    %c0_4 = arith.constant 0 : index
    %c0_5 = arith.constant 0 : index
    %c0_6 = arith.constant 0 : index
    %23 = vector.load %arg2[%c0_4, %c0_5, %c0_6] : memref<4x16x16xf32, #tpu.memory_space<vmem>>, vector<4x16x16xf32>
    tpu.vector_store %arg2[%c0_4, %c0_5, %c0_6], %22 {strides = array<i32>} : memref<4x16x16xf32, #tpu.memory_space<vmem>>, vector<4x16x16xf32>,
    return
  }
  func.func @transform_0(%arg0: i32) -> (i32, i32, i32) {
    %c0_i32 = arith.constant 0 : i32
    %c0_i32_0 = arith.constant 0 : i32
    %c0_i32_1 = arith.constant 0 : i32
    return %arg0, %c0_i32, %c0_i32_0 : i32, i32, i32
  }
  func.func @transform_1(%arg0: i32) -> (i32, i32, i32) {
    %c0_i32 = arith.constant 0 : i32
    %c0_i32_0 = arith.constant 0 : i32
    %c0_i32_1 = arith.constant 0 : i32
    return %arg0, %c0_i32, %c0_i32_0 : i32, i32, i32
  }
}

</mosaic_0001>

<llo_original>
// kernel: tpu_custom_call.1
$region0: #{tpu_custom_call.1}
  #allocation0 [shape = 'u32[]', space=smem, size = 0x4, offset = 0x4, fixed_abs, tag = 'smem constant byte address 0x4 - core index']
  #allocation1 [shape = 'u32[144,128]{1,0:T(1,128)}', space=vmem, size = 0x12000, scoped, tag = 'internal scratch']
  %s0 = inlined_call_operand.hbm [shape: f32[8,16,16], index: 0, kind: input, shape index: {}]
  %s1 = inlined_call_operand.hbm [shape: f32[8,16,16], index: 1, kind: output, shape index: {}]
  %s2 = sld [smem:[#allocation0]]
  $region41: #{tpu_custom_call.1} parent=0
    _
  %s4 = ssub.s32 1, %s2
  %s5 = scalar_select 0, %s4, %s2
  $region1: #{tpu_custom_call.1} parent=0
    #allocation2 [shape = 'u8[65536]{0}', space=vmem, size = 0x10000, scoped, tag = 'input window, operand 0']
    #allocation3 [shape = 's32[2]{0}', space=sflag, size = 0x8, scoped, tag = 'scoped memory for tpu_custom_call.1']
    #allocation4 [shape = 's32[2]{0}', space=sflag, size = 0x8, scoped, tag = 'scoped memory for tpu_custom_call.1']
    #allocation5 [shape = 'u8[65536]{0}', space=vmem, size = 0x10000, scoped, tag = 'output window, operand 0']
    %6 = vsyncpa [#allocation3], 0
    %s7 = scalar_lea.sflag [#allocation3], 1
    %8 = vsyncpa %s7, 0
    %9 = vsyncpa [#allocation4], 0
    %s10 = scalar_lea.sflag [#allocation4], 1
    %11 = vsyncpa %s10, 0
    loop: start=0, step=1, limit=4
    $region2: #{tpu_custom_call.1} parent=1 // loop_pre_header
      _
    $region3: #{tpu_custom_call.1} parent=1 // loop_header
      %s13 = sphi 0, %s17
      %p14 = scmp.ge.s32.totalorder %s13, 4
      %s23 = sphi 0, %s25
      %s26 = sphi 0, %s23
      %s27 = sphi 0, %s26
      %s43 = sphi 0, %s27
      %s49 = sphi 0, %s51
      %s52 = sphi 0, %s49
      %s53 = sphi 0, %s52
      %s69 = sphi 0, %s53
    $region4: #{tpu_custom_call.1} parent=1 // loop_header_branch
      %16 = sbr.rel (%p14) target = $region8
    $region5: #{tpu_custom_call.1} parent=1 // loop_body
      %s18 = ssub.s32 %s13, 1
      %s19 = ssub.s32 %s13, 2
      %s20 = sadd.s32 %s13, 1
      %s21 = ssub.s32 %s13, %s20
      %p22 = scmp.eq.s32.totalorder %s21, 0
      %s24 = sadd.s32 %s23, 1
      %s25 = scalar_select %p22, %s23, %s24
      %p28 = pneg %p22
      %p29 = scmp.eq.s32.totalorder %s13, 1
      %p30 = por %p28, %p29
      %p31 = scmp.ne.s32.totalorder %s23, %s26
      %p32 = scmp.eq.s32.totalorder %s13, 0
      %p33 = por %p31, %p32
      %p34 = scmp.ne.s32.totalorder %s23, %s26
      %p35 = scmp.eq.s32.totalorder %s18, 1
      %p36 = por %p34, %p35
      %p37 = scmp.ne.s32.totalorder %s26, %s27
      %p38 = scmp.eq.s32.totalorder %s18, 0
      %p39 = por %p37, %p38
      %p40 = scmp.ne.s32.totalorder %s26, %s27
      %p41 = scmp.eq.s32.totalorder %s19, 1
      %p42 = por %p40, %p41
      %p44 = scmp.ne.s32.totalorder %s27, %s43
      %p45 = scmp.eq.s32.totalorder %s19, 0
      %p46 = por %p44, %p45
      %s47 = ssub.s32 %s13, %s20
      %p48 = scmp.eq.s32.totalorder %s47, 0
      %s50 = sadd.s32 %s49, 1
      %s51 = scalar_select %p48, %s49, %s50
      %p54 = pneg %p48
      %p55 = scmp.eq.s32.totalorder %s13, 1
      %p56 = por %p54, %p55
      %p57 = scmp.ne.s32.totalorder %s49, %s52
      %p58 = scmp.eq.s32.totalorder %s13, 0
      %p59 = por %p57, %p58
      %p60 = scmp.ne.s32.totalorder %s49, %s52
      %p61 = scmp.eq.s32.totalorder %s18, 1
      %p62 = por %p60, %p61
      %p63 = scmp.ne.s32.totalorder %s52, %s53
      %p64 = scmp.eq.s32.totalorder %s18, 0
      %p65 = por %p63, %p64
      %p66 = scmp.ne.s32.totalorder %s52, %s53
      %p67 = scmp.eq.s32.totalorder %s19, 1
      %p68 = por %p66, %p67
      %p70 = scmp.ne.s32.totalorder %s53, %s69
      %p71 = scmp.eq.s32.totalorder %s19, 0
      %p72 = por %p70, %p71
      %p73 = scmp.le.s32.totalorder 1, %s13
      %p74 = scmp.lt.s32.totalorder %s13, 3
      %p75 = pnand %p73, %p74
      %p76 = pneg %p75
      // Predicated region
      $region9: #{tpu_custom_call.1} parent=5 // pred_check
        _
      $region10: #{tpu_custom_call.1} parent=5 // pred_check_branch
        %78 = sbr.rel (%p75) target = $region12
      $region11: #{tpu_custom_call.1} parent=5 // pred_region
        %s79 = ssub.s32 %s13, 1
      $region12: #{tpu_custom_call.1} parent=5 // pred_fallthru
        _
      %p80 = scmp.lt.s32.totalorder %s13, 2
      // Predicated region
      $region13: #{tpu_custom_call.1} parent=5 // pred_check
        %p81 = pneg %p80
      $region14: #{tpu_custom_call.1} parent=5 // pred_check_branch
        %83 = sbr.rel (%p81) target = $region16
      $region15: #{tpu_custom_call.1} parent=5 // pred_region
        // Predicated region
        $region17: #{tpu_custom_call.1} parent=15 // pred_check
          %p84 = pneg %p33
        $region18: #{tpu_custom_call.1} parent=15 // pred_check_branch
          %86 = sbr.rel (%p84) target = $region20
        $region19: #{tpu_custom_call.1} parent=15 // pred_region
          %s87 = sand.u32 %s23, 1
          %s88 = scalar_lea.sflag [#allocation3], %s87
          %s89 = sand.u32 %s23, 1
          %s90 = smul.addr %s89, 64
          %s91 = scalar_lea.vmem [#allocation2], %s90
          %s92 = smul.u32 4, %s13
          %s94 = ssub.s32 1024, 1024
          %95 = vsyncadd %s88, %s94
          %s96 = smul.addr %s92, 2
          %s97 = smul.addr %s96, 128
          %s98 = scalar_lea.hbm %s0, %s97
          %s99 = sshll.u32 %s91, 4
          %s100 = int_to_ptr.vmem [resolvable:$true] %s99
          %105 = dma.hbm_to_vmem [thread:$0]  %s98, 1024, %s100, %s88, 128, 128, 8
        $region20: #{tpu_custom_call.1} parent=15 // pred_fallthru
          _
      $region16: #{tpu_custom_call.1} parent=5 // pred_fallthru
        _
      %p106 = scmp.le.s32.totalorder 1, %s13
      %p107 = scmp.lt.s32.totalorder %s13, 3
      %p108 = pnand %p106, %p107
      %p109 = pneg %p108
      // Predicated region
      $region21: #{tpu_custom_call.1} parent=5 // pred_check
        _
      $region22: #{tpu_custom_call.1} parent=5 // pred_check_branch
        %111 = sbr.rel (%p108) target = $region24
      $region23: #{tpu_custom_call.1} parent=5 // pred_region
        %s112 = ssub.s32 %s13, 1
        %s113 = sand.u32 %s26, 1
        %s114 = scalar_lea.sflag [#allocation3], %s113
        %s115 = sand.u32 %s26, 1
        %s116 = smul.addr %s115, 64
        %s117 = scalar_lea.vmem [#allocation2], %s116
        // Predicated region
        $region25: #{tpu_custom_call.1} parent=23 // pred_check
          %p118 = pneg %p39
        $region26: #{tpu_custom_call.1} parent=23 // pred_check_branch
          %120 = sbr.rel (%p118) target = $region28
        $region27: #{tpu_custom_call.1} parent=23 // pred_region
          %121 = dma.done %s114, 1024
        $region28: #{tpu_custom_call.1} parent=23 // pred_fallthru
          _
        %s122 = sand.u32 %s26, 1
        %s123 = scalar_lea.sflag [#allocation3], %s122
        %s124 = sand.u32 %s26, 1
        %s125 = smul.addr %s124, 64
        %s126 = scalar_lea.vmem [#allocation2], %s125
        %p127 = pneg %p39
        %p128 = pneg %p36
        %p129 = pneg %p65
        %p130 = pneg %p62
        %s131 = sand.u32 %s52, 1
        %s132 = scalar_lea.sflag [#allocation4], %s131
        %s133 = sand.u32 %s52, 1
        %s134 = smul.addr %s133, 64
        %s135 = scalar_lea.vmem [#allocation5], %s134
        %s136 = smul.u32 4, %s18
        %s137 = smul.u32 4, %s18
        %v138 = vld [vmem:[%s117] sm:$0xff]
        %v139 = vld [vmem:[%s117 + $0x8] sm:$0xff]
        %v140 = vld [vmem:[%s117 + $0x10] sm:$0xff]
        %v141 = vld [vmem:[%s117 + $0x18] sm:$0xff]
        %v142 = vld [vmem:[%s117 + $0x20] sm:$0xff]
        %v143 = vld [vmem:[%s117 + $0x28] sm:$0xff]
        %v144 = vld [vmem:[%s117 + $0x30] sm:$0xff]
        %v145 = vld [vmem:[%s117 + $0x38] sm:$0xff]
        %154 = vrot.lane.b32.xlu0 %v138, 127
        %v155 = vpop.permute.xlu0 %154
        %156 = vrot.lane.b32.xlu0 %v139, 127
        %v157 = vpop.permute.xlu0 %156
        %158 = vrot.lane.b32.xlu0 %v140, 127
        %v159 = vpop.permute.xlu0 %158
        %160 = vrot.lane.b32.xlu0 %v141, 127
        %v161 = vpop.permute.xlu0 %160
        %162 = vrot.lane.b32.xlu0 %v142, 127
        %v163 = vpop.permute.xlu0 %162
        %164 = vrot.lane.b32.xlu0 %v143, 127
        %v165 = vpop.permute.xlu0 %164
        %166 = vrot.lane.b32.xlu0 %v144, 127
        %v167 = vpop.permute.xlu0 %166
        %168 = vrot.lane.b32.xlu0 %v145, 127
        %v169 = vpop.permute.xlu0 %168
        %178 = vrot.lane.b32.xlu0 %v138, 1
        %v179 = vpop.permute.xlu0 %178
        %180 = vrot.lane.b32.xlu0 %v139, 1
        %v181 = vpop.permute.xlu0 %180
        %182 = vrot.lane.b32.xlu0 %v140, 1
        %v183 = vpop.permute.xlu0 %182
        %184 = vrot.lane.b32.xlu0 %v141, 1
        %v185 = vpop.permute.xlu0 %184
        %186 = vrot.lane.b32.xlu0 %v142, 1
        %v187 = vpop.permute.xlu0 %186
        %188 = vrot.lane.b32.xlu0 %v143, 1
        %v189 = vpop.permute.xlu0 %188
        %190 = vrot.lane.b32.xlu0 %v144, 1
        %v191 = vpop.permute.xlu0 %190
        %192 = vrot.lane.b32.xlu0 %v145, 1
        %v193 = vpop.permute.xlu0 %192
        %vm202 = vcmask 7168
        %v203 = vsel %vm202, %v155, %v179
        %v204 = vsel %vm202, %v157, %v181
        %v205 = vsel %vm202, %v159, %v183
        %v206 = vsel %vm202, %v161, %v185
        %v207 = vsel %vm202, %v163, %v187
        %v208 = vsel %vm202, %v165, %v189
        %v209 = vsel %vm202, %v167, %v191
        %v210 = vsel %vm202, %v169, %v193
        %vm211 = vcmask 121856
        %v212 = vsel %vm211, %v155, %v179
        %v213 = vsel %vm211, %v157, %v181
        %v214 = vsel %vm211, %v159, %v183
        %v215 = vsel %vm211, %v161, %v185
        %v216 = vsel %vm211, %v163, %v187
        %v217 = vsel %vm211, %v165, %v189
        %v218 = vsel %vm211, %v167, %v191
        %v219 = vsel %vm211, %v169, %v193
        %v220 = vmul.f32 %v138, 2.0
        %v221 = vmul.f32 %v139, 2.0
        %v222 = vmul.f32 %v140, 2.0
        %v223 = vmul.f32 %v141, 2.0
        %v224 = vmul.f32 %v142, 2.0
        %v225 = vmul.f32 %v143, 2.0
        %v226 = vmul.f32 %v144, 2.0
        %v227 = vmul.f32 %v145, 2.0
        %v228 = vadd.f32 %v203, %v220
        %v229 = vadd.f32 %v204, %v221
        %v230 = vadd.f32 %v205, %v222
        %v231 = vadd.f32 %v206, %v223
        %v232 = vadd.f32 %v207, %v224
        %v233 = vadd.f32 %v208, %v225
        %v234 = vadd.f32 %v209, %v226
        %v235 = vadd.f32 %v210, %v227
        %v236 = vadd.f32 %v228, %v212
        %v237 = vadd.f32 %v229, %v213
        %v238 = vadd.f32 %v230, %v214
        %v239 = vadd.f32 %v231, %v215
        %v240 = vadd.f32 %v232, %v216
        %v241 = vadd.f32 %v233, %v217
        %v242 = vadd.f32 %v234, %v218
        %v243 = vadd.f32 %v235, %v219
        %v248 = vrot.slane %v236, 1
        %v249 = vrot.slane %v238, 1
        %v250 = vrot.slane %v240, 1
        %v251 = vrot.slane %v242, 1
        %vm260 = vcmask 1040384
        %v261 = vrot.slane %v236, 7
        %v262 = vrot.slane %v237, 7
        %v263 = vsel %vm260, %v261, %v262
        %v264 = vrot.slane %v238, 7
        %v265 = vrot.slane %v239, 7
        %v266 = vsel %vm260, %v264, %v265
        %v267 = vrot.slane %v240, 7
        %v268 = vrot.slane %v241, 7
        %v269 = vsel %vm260, %v267, %v268
        %v270 = vrot.slane %v242, 7
        %v271 = vrot.slane %v243, 7
        %v272 = vsel %vm260, %v270, %v271
        %v281 = vsel %vm260, %v248, %v261
        %v282 = vsel %vm260, %v249, %v264
        %v283 = vsel %vm260, %v250, %v267
        %v284 = vsel %vm260, %v251, %v270
        %vm285 = vcmask 1046528
        %v286 = vrot.slane %v237, 1
        %v287 = vsel %vm285, %v248, %v286
        %v288 = vrot.slane %v239, 1
        %v289 = vsel %vm285, %v249, %v288
        %v290 = vrot.slane %v241, 1
        %v291 = vsel %vm285, %v250, %v290
        %v292 = vrot.slane %v243, 1
        %v293 = vsel %vm285, %v251, %v292
        %v306 = vsel %vm285, %v286, %v262
        %v307 = vsel %vm285, %v288, %v265
        %v308 = vsel %vm285, %v290, %v268
        %v309 = vsel %vm285, %v292, %v271
        %v310 = vmul.f32 %v236, 2.0
        %v311 = vmul.f32 %v237, 2.0
        %v312 = vmul.f32 %v238, 2.0
        %v313 = vmul.f32 %v239, 2.0
        %v314 = vmul.f32 %v240, 2.0
        %v315 = vmul.f32 %v241, 2.0
        %v316 = vmul.f32 %v242, 2.0
        %v317 = vmul.f32 %v243, 2.0
        %v318 = vadd.f32 %v281, %v310
        %v319 = vadd.f32 %v263, %v311
        %v320 = vadd.f32 %v282, %v312
        %v321 = vadd.f32 %v266, %v313
        %v322 = vadd.f32 %v283, %v314
        %v323 = vadd.f32 %v269, %v315
        %v324 = vadd.f32 %v284, %v316
        %v325 = vadd.f32 %v272, %v317
        %v326 = vadd.f32 %v318, %v287
        %v327 = vadd.f32 %v319, %v306
        %v328 = vadd.f32 %v320, %v289
        %v329 = vadd.f32 %v321, %v307
        %v330 = vadd.f32 %v322, %v291
        %v331 = vadd.f32 %v323, %v308
        %v332 = vadd.f32 %v324, %v293
        %v333 = vadd.f32 %v325, %v309
        %v334 = vmul.f32 %v326, 0.0625
        %v335 = vmul.f32 %v327, 0.0625
        %v336 = vmul.f32 %v328, 0.0625
        %v337 = vmul.f32 %v329, 0.0625
        %v338 = vmul.f32 %v330, 0.0625
        %v339 = vmul.f32 %v331, 0.0625
        %v340 = vmul.f32 %v332, 0.0625
        %v341 = vmul.f32 %v333, 0.0625
        %vm342 = vcmask 130048
        %343 = vst.msk [vmem:[%s135] sm:$0xff] %vm342, %v334
        %344 = vst.msk [vmem:[%s135 + $0x8] sm:$0xff] %vm342, %v335
        %345 = vst.msk [vmem:[%s135 + $0x10] sm:$0xff] %vm342, %v336
        %346 = vst.msk [vmem:[%s135 + $0x18] sm:$0xff] %vm342, %v337
        %347 = vst.msk [vmem:[%s135 + $0x20] sm:$0xff] %vm342, %v338
        %348 = vst.msk [vmem:[%s135 + $0x28] sm:$0xff] %vm342, %v339
        %349 = vst.msk [vmem:[%s135 + $0x30] sm:$0xff] %vm342, %v340
        %350 = vst.msk [vmem:[%s135 + $0x38] sm:$0xff] %vm342, %v341
        %s351 = sand.u32 %s52, 1
        %s352 = scalar_lea.sflag [#allocation4], %s351
        %s353 = sand.u32 %s52, 1
        %s354 = smul.addr %s353, 64
        %s355 = scalar_lea.vmem [#allocation5], %s354
        // Predicated region
        $region29: #{tpu_custom_call.1} parent=23 // pred_check
          %p356 = pneg %p62
        $region30: #{tpu_custom_call.1} parent=23 // pred_check_branch
          %358 = sbr.rel (%p356) target = $region32
        $region31: #{tpu_custom_call.1} parent=23 // pred_region
          %s359 = smul.u32 4, %s18
          %s361 = ssub.s32 1024, 1024
          %362 = vsyncadd %s352, %s361
          %s363 = smul.addr %s359, 2
          %s364 = smul.addr %s363, 128
          %s365 = scalar_lea.hbm %s1, %s364
          %s366 = sshll.u32 %s355, 4
          %s367 = int_to_ptr.vmem [resolvable:$true] %s366
          %372 = dma.vmem_to_hbm [thread:$0]  %s367, 1024, %s365, %s352, 128, 128, 8
        $region32: #{tpu_custom_call.1} parent=23 // pred_fallthru
          _
      $region24: #{tpu_custom_call.1} parent=5 // pred_fallthru
        _
      %p373 = scmp.le.s32.totalorder 2, %s13
      // Predicated region
      $region33: #{tpu_custom_call.1} parent=5 // pred_check
        %p374 = pneg %p373
      $region34: #{tpu_custom_call.1} parent=5 // pred_check_branch
        %376 = sbr.rel (%p374) target = $region36
      $region35: #{tpu_custom_call.1} parent=5 // pred_region
        %s377 = ssub.s32 %s13, 2
        // Predicated region
        $region37: #{tpu_custom_call.1} parent=35 // pred_check
          %p378 = pneg %p68
        $region38: #{tpu_custom_call.1} parent=35 // pred_check_branch
          %380 = sbr.rel (%p378) target = $region40
        $region39: #{tpu_custom_call.1} parent=35 // pred_region
          %s381 = sand.u32 %s53, 1
          %s382 = scalar_lea.sflag [#allocation4], %s381
          %s383 = sand.u32 %s53, 1
          %s384 = smul.addr %s383, 64
          %s385 = scalar_lea.vmem [#allocation5], %s384
          %386 = dma.done %s382, 1024
        $region40: #{tpu_custom_call.1} parent=35 // pred_fallthru
          _
      $region36: #{tpu_custom_call.1} parent=5 // pred_fallthru
        _
    $region6: #{tpu_custom_call.1} parent=1 // loop_footer
      %s17 = sadd.s32 1, %s13
    $region7: #{tpu_custom_call.1} parent=1 // loop_footer_branch
      %12 = sbr.rel target = $region3
    $region8: #{tpu_custom_call.1} parent=1 // loop_exit
      _
    %387 = vsyncpa [#allocation3], 1
    %s388 = scalar_lea.sflag [#allocation3], 1
    %389 = vsyncpa %s388, 1
    %390 = vsyncpa [#allocation4], 1
    %s391 = scalar_lea.sflag [#allocation4], 1
    %392 = vsyncpa %s391, 1

</llo_original>
